<compile_context>
chip_gen: v7x
topology: tpu7x:2x2x1
jax: 0.10.0
libtpu: 0.0.40
codegen_flags: <defaults>
</compile_context>

<pallas_src>
import functools

import jax
import jax.numpy as jnp
from jax import lax
from jax.experimental import pallas as pl
from jax.experimental.pallas import tpu as pltpu

_LANE = 128
_SUBLANE = 8


def _round_up(x, m):
    return (x + m - 1) // m * m


# ---------------------------------------------------------------------------
# Pallas kernel: fused-tap (K = k*k*Cin) shift-and-matmul conv, one image/step.
# ---------------------------------------------------------------------------
def _conv_fused_kernel(x_ref, w_ref, o_ref, rhs_ref, *, tap_offsets, cin,
                       m_pad, stride):
    """One grid step == one image of the rot4-expanded batch.

      x_ref:   (Cin, P_in)     f32 flat padded pixels (pixels on the lane axis)
      w_ref:   (n_pad, Kf)     f32, Kf = k*k*Cin, groups fused block-diagonally
      o_ref:   (n_pad, m_pad)  f32 output block, m_pad = round_up(Ho*Wp, 128)
      rhs_ref: (Kf, m_pad)     f32 VMEM scratch holding the tap-stacked input

    Output row m = ho*Wp + wo needs input pixel  stride*m + (kh*Wp + kw)  for
    tap (kh, kw), so each tap is just a static-offset slice of the flat pixel
    axis.  Every tap is staged ONCE into rhs_ref, then the whole convolution
    is a single MXU matmul with a single output write (no per-tap
    accumulation traffic on the vector-store slot).
    """
    for t, off in enumerate(tap_offsets):
        if stride == 1:
            rhs_ref[t * cin:(t + 1) * cin, :] = x_ref[:, off:off + m_pad]
        else:
            # TODO(synk): general-stride path is untested by the demo shapes.
            rhs_ref[t * cin:(t + 1) * cin, :] = x_ref[:, pl.ds(off, m_pad,
                                                               stride=stride)]
    o_ref[...] = jnp.dot(w_ref[...], rhs_ref[...],
                         preferred_element_type=jnp.float32)


def _rot4_conv_pallas(xp, weight0, stride, groups):
    """conv2d(xp, weight0, stride=stride, groups=groups, dilation=1, VALID)
    lowered to the fused-tap Pallas kernel.  xp is NCHW float32 (padded)."""
    B4, C, Hp, Wp = xp.shape
    cout, cg, k, _ = weight0.shape
    assert cg * groups == C, (cg, groups, C)
    og = cout // groups
    s = int(stride)

    Ho = (Hp - k) // s + 1
    Wo = (Wp - k) // s + 1
    n_taps = k * k
    tap_offsets = tuple(kh * Wp + kw for kh in range(k) for kw in range(k))
    Kf = n_taps * C

    m_full = Ho * Wp                      # flat output rows, decoded as (Ho, Wp)
    m_pad = _round_up(m_full, _LANE)      # lane-dense (unmasked) output stores
    n_pad = _round_up(cout, _SUBLANE)     # sublane-dense channel axis (NOT 128)
    # NOTE: for large Cout (>= 256) the channel axis should additionally be
    # tiled at 256 (v6e/v7x MXU width) via an extra grid axis; not needed here.

    # Flat input pixels, zero-padded so every tap slice of length m_pad stays
    # in bounds (extra columns compute zeros and are sliced off afterwards).
    max_off = (k - 1) * Wp + (k - 1)
    p_in = _round_up(s * (m_pad - 1) + max_off + 1, _LANE)
    x_flat = xp.reshape(B4, C, Hp * Wp).astype(jnp.float32)
    x_flat = jnp.pad(x_flat, ((0, 0), (0, 0), (0, p_in - Hp * Wp)))

    # Fused weight (n_pad, k*k*Cin): groups placed block-diagonally so one
    # matmul covers every group; padded output channels are all-zero rows.
    w_fused = jnp.zeros((n_pad, Kf), jnp.float32)
    for gi in range(groups):
        wg = weight0[gi * og:(gi + 1) * og]                    # (og, cg, k, k)
        wt = jnp.transpose(wg, (0, 2, 3, 1)).reshape(og, n_taps, cg)
        for t in range(n_taps):
            w_fused = w_fused.at[
                gi * og:(gi + 1) * og,
                t * C + gi * cg: t * C + (gi + 1) * cg].set(wt[:, t, :])

    kernel = functools.partial(_conv_fused_kernel, tap_offsets=tap_offsets,
                               cin=C, m_pad=m_pad, stride=s)

    # Explicit VMEM budget: double-buffered input/output blocks + (tiny,
    # resident) weight + the RHS scratch, with headroom; clamp <= 48 MiB so
    # the same code is safe on v7x's 64 MiB VMEM.
    in_blk = _round_up(C, _SUBLANE) * p_in * 4
    out_blk = n_pad * m_pad * 4
    w_blk = n_pad * _round_up(Kf, _LANE) * 4
    scratch_blk = _round_up(Kf, _SUBLANE) * m_pad * 4
    vmem_limit = 2 * (in_blk + out_blk + w_blk) + scratch_blk + (2 << 20)
    vmem_limit = int(min(max(vmem_limit, 8 << 20), 48 << 20))

    out_flat = pl.pallas_call(
        kernel,
        out_shape=jax.ShapeDtypeStruct((B4, n_pad, m_pad), jnp.float32),
        grid_spec=pltpu.PrefetchScalarGridSpec(
            num_scalar_prefetch=0,
            grid=(B4,),                                   # one image per step
            in_specs=[
                pl.BlockSpec((None, C, p_in), lambda i: (i, 0, 0)),
                pl.BlockSpec((n_pad, Kf), lambda i: (0, 0)),   # resident weight
            ],
            out_specs=pl.BlockSpec((None, n_pad, m_pad), lambda i: (i, 0, 0)),
            scratch_shapes=[pltpu.VMEM((Kf, m_pad), jnp.float32)],
        ),
        compiler_params=pltpu.CompilerParams(
            dimension_semantics=("parallel",),   # 4*B steps -> both v7x TCs busy
            vmem_limit_bytes=vmem_limit,
        ),
    )(x_flat, w_fused)

    # Decode: keep real channels, keep valid flat rows, crop columns wo < Wo.
    out = out_flat[:, :cout, :m_full].reshape(B4, cout, Ho, Wp)
    return out[:, :, :, :Wo]


# ---------------------------------------------------------------------------
# PreCM1 module (JAX / Pallas)
# ---------------------------------------------------------------------------
class PreCM1:
    def __init__(self, in_channels, out_channels, kernel_size, stride,
                 dilation, groups=1, bias=0, *, key):
        self.in_channels = in_channels
        self.out_channels = out_channels
        self.kernel_size = kernel_size
        self.stride = stride
        self.groups = groups
        self.dilation = dilation
        self.bias = bias
        # Deterministic init of the (uninitialized-in-PyTorch) weight tensor.
        self.weight0 = 0.1 * jax.random.normal(
            key,
            (out_channels, in_channels // groups, kernel_size, kernel_size),
            dtype=jnp.float32,
        )
        # NOTE: `convtest` from the PyTorch module is never used in forward().

    def __call__(self, x, output_shape):
        ho, wo = int(output_shape[0]), int(output_shape[1])
        b, c, h, w = x.shape
        k, s, d = self.kernel_size, self.stride, self.dilation

        # PyTorch padding arithmetic.  Note: pab is derived from (h, ho) but,
        # per F.pad(padding=(pa, pb, pl, pr)) semantics, (pa, pb) pads the W
        # axis and (pl, pr) pads the H axis — reproduced faithfully here
        # (identical when H == W, which rot90+concat along batch requires).
        pab = (ho - 1) * s + d * (k - 1) + 1 - h
        prl = (wo - 1) * s + d * (k - 1) + 1 - w
        pb = int(pab // 2)
        pl_ = int(prl // 2)
        pa = pab - pb
        pr = prl - pl_

        # torch.cat([x, rot90(x,-1), rot90(x,-2), rot90(x,-3)], dim=0)
        x4 = jnp.concatenate(
            [
                x,
                jnp.rot90(x, k=-1, axes=(2, 3)),
                jnp.rot90(x, k=-2, axes=(2, 3)),
                jnp.rot90(x, k=-3, axes=(2, 3)),
            ],
            axis=0,
        )

        # F.pad(x, (pa, pb, pl, pr)); lax.pad also handles negative (crop) pads.
        xp = lax.pad(x4, jnp.asarray(0.0, x4.dtype),
                     ((0, 0, 0), (0, 0, 0), (pl_, pr, 0), (pa, pb, 0)))

        return _rot4_conv_pallas(xp, self.weight0, s, self.groups)


# ---------------------------------------------------------------------------
# lax.conv reference (float32, highest precision)
# ---------------------------------------------------------------------------
def _reference(mod, x, output_shape):
    ho, wo = int(output_shape[0]), int(output_shape[1])
    b, c, h, w = x.shape
    k, s, d = mod.kernel_size, mod.stride, mod.dilation
    pab = (ho - 1) * s + d * (k - 1) + 1 - h
    prl = (wo - 1) * s + d * (k - 1) + 1 - w
    pb = int(pab // 2)
    pl_ = int(prl // 2)
    pa = pab - pb
    pr = prl - pl_
    x4 = jnp.concatenate(
        [x,
         jnp.rot90(x, k=-1, axes=(2, 3)),
         jnp.rot90(x, k=-2, axes=(2, 3)),
         jnp.rot90(x, k=-3, axes=(2, 3))], axis=0)
    xp = lax.pad(x4, jnp.asarray(0.0, x4.dtype),
                 ((0, 0, 0), (0, 0, 0), (pl_, pr, 0), (pa, pb, 0)))
    return lax.conv_general_dilated(
        xp, mod.weight0,
        window_strides=(s, s), padding="VALID",
        dimension_numbers=("NCHW", "OIHW", "NCHW"),
        feature_group_count=mod.groups,
        precision=lax.Precision.HIGHEST,
        preferred_element_type=jnp.float32)


if __name__ == "__main__":
    key = jax.random.PRNGKey(0)
    k_w, k_x = jax.random.split(key)

    B, Cin, H, W = 2, 4, 16, 16
    Cout, KS, STRIDE, DIL = 8, 3, 1, 1
    output_shape = (16, 16)

    mod = PreCM1(Cin, Cout, KS, STRIDE, DIL, groups=1, bias=0, key=k_w)
    x = jax.random.normal(k_x, (B, Cin, H, W), dtype=jnp.float32)

    fwd = jax.jit(lambda inp: mod(inp, output_shape))
    out = jax.block_until_ready(fwd(x))

    ref = jax.block_until_ready(_reference(mod, x, output_shape))
    assert out.shape == ref.shape, (out.shape, ref.shape)
    max_err = float(jnp.max(jnp.abs(out - ref)))
    assert max_err < 1e-3, max_err

    print("KERNEL_OK")
</pallas_src>

<mosaic_0001>
module attributes {stable_mosaic.version = 11 : i64} {
  func.func @_conv_fused_kernel(%arg0: i32, %arg1: memref<1x4x512xf32, #tpu.memory_space<vmem>>, %arg2: memref<8x36xf32, #tpu.memory_space<vmem>>, %arg3: memref<1x8x384xf32, #tpu.memory_space<vmem>>, %arg4: memref<36x384xf32, #tpu.memory_space<vmem>>) attributes {dimension_semantics = [#tpu.dimension_semantics<parallel>], iteration_bounds = array<i64: 8>, scalar_prefetch = 0 : i64, scratch_operands = 1 : i64, tpu.core_type = #tpu.core_type<tc>, window_params = [{transform_indices = @transform_0, window_bounds = array<i64: 1, 4, 512>}, {pipeline_mode = #tpu.pipeline_mode<synchronous>, transform_indices = @transform_1, window_bounds = array<i64: 8, 36>}, {transform_indices = @transform_2, window_bounds = array<i64: 1, 8, 384>}]} {
    %c0 = arith.constant 0 : index
    %c0_0 = arith.constant 0 : index
    %c0_1 = arith.constant 0 : index
    %0 = vector.load %arg1[%c0, %c0_0, %c0_1] : memref<1x4x512xf32, #tpu.memory_space<vmem>>, vector<1x4x384xf32>
    %1 = vector.shape_cast %0 : vector<1x4x384xf32> to vector<4x384xf32>
    %c0_2 = arith.constant 0 : index
    %c0_3 = arith.constant 0 : index
    %2 = vector.load %arg4[%c0_2, %c0_3] : memref<36x384xf32, #tpu.memory_space<vmem>>, vector<4x384xf32>
    tpu.vector_store %arg4[%c0_2, %c0_3], %1 {strides = array<i32>} : memref<36x384xf32, #tpu.memory_space<vmem>>, vector<4x384xf32>,
    %c0_4 = arith.constant 0 : index
    %c0_5 = arith.constant 0 : index
    %c1 = arith.constant 1 : index
    %3 = vector.load %arg1[%c0_4, %c0_5, %c1] : memref<1x4x512xf32, #tpu.memory_space<vmem>>, vector<1x4x384xf32>
    %4 = vector.shape_cast %3 : vector<1x4x384xf32> to vector<4x384xf32>
    %c4 = arith.constant 4 : index
    %c0_6 = arith.constant 0 : index
    %5 = vector.load %arg4[%c4, %c0_6] : memref<36x384xf32, #tpu.memory_space<vmem>>, vector<4x384xf32>
    tpu.vector_store %arg4[%c4, %c0_6], %4 {strides = array<i32>} : memref<36x384xf32, #tpu.memory_space<vmem>>, vector<4x384xf32>,
    %c0_7 = arith.constant 0 : index
    %c0_8 = arith.constant 0 : index
    %c2 = arith.constant 2 : index
    %6 = vector.load %arg1[%c0_7, %c0_8, %c2] : memref<1x4x512xf32, #tpu.memory_space<vmem>>, vector<1x4x384xf32>
    %7 = vector.shape_cast %6 : vector<1x4x384xf32> to vector<4x384xf32>
    %c8 = arith.constant 8 : index
    %c0_9 = arith.constant 0 : index
    %8 = vector.load %arg4[%c8, %c0_9] : memref<36x384xf32, #tpu.memory_space<vmem>>, vector<4x384xf32>
    tpu.vector_store %arg4[%c8, %c0_9], %7 {strides = array<i32>} : memref<36x384xf32, #tpu.memory_space<vmem>>, vector<4x384xf32>,
    %c0_10 = arith.constant 0 : index
    %c0_11 = arith.constant 0 : index
    %c18 = arith.constant 18 : index
    %9 = vector.load %arg1[%c0_10, %c0_11, %c18] : memref<1x4x512xf32, #tpu.memory_space<vmem>>, vector<1x4x384xf32>
    %10 = vector.shape_cast %9 : vector<1x4x384xf32> to vector<4x384xf32>
    %c12 = arith.constant 12 : index
    %c0_12 = arith.constant 0 : index
    %11 = vector.load %arg4[%c12, %c0_12] : memref<36x384xf32, #tpu.memory_space<vmem>>, vector<4x384xf32>
    tpu.vector_store %arg4[%c12, %c0_12], %10 {strides = array<i32>} : memref<36x384xf32, #tpu.memory_space<vmem>>, vector<4x384xf32>,
    %c0_13 = arith.constant 0 : index
    %c0_14 = arith.constant 0 : index
    %c19 = arith.constant 19 : index
    %12 = vector.load %arg1[%c0_13, %c0_14, %c19] : memref<1x4x512xf32, #tpu.memory_space<vmem>>, vector<1x4x384xf32>
    %13 = vector.shape_cast %12 : vector<1x4x384xf32> to vector<4x384xf32>
    %c16 = arith.constant 16 : index
    %c0_15 = arith.constant 0 : index
    %14 = vector.load %arg4[%c16, %c0_15] : memref<36x384xf32, #tpu.memory_space<vmem>>, vector<4x384xf32>
    tpu.vector_store %arg4[%c16, %c0_15], %13 {strides = array<i32>} : memref<36x384xf32, #tpu.memory_space<vmem>>, vector<4x384xf32>,
    %c0_16 = arith.constant 0 : index
    %c0_17 = arith.constant 0 : index
    %c20 = arith.constant 20 : index
    %15 = vector.load %arg1[%c0_16, %c0_17, %c20] : memref<1x4x512xf32, #tpu.memory_space<vmem>>, vector<1x4x384xf32>
    %16 = vector.shape_cast %15 : vector<1x4x384xf32> to vector<4x384xf32>
    %c20_18 = arith.constant 20 : index
    %c0_19 = arith.constant 0 : index
    %17 = vector.load %arg4[%c20_18, %c0_19] : memref<36x384xf32, #tpu.memory_space<vmem>>, vector<4x384xf32>
    tpu.vector_store %arg4[%c20_18, %c0_19], %16 {strides = array<i32>} : memref<36x384xf32, #tpu.memory_space<vmem>>, vector<4x384xf32>,
    %c0_20 = arith.constant 0 : index
    %c0_21 = arith.constant 0 : index
    %c36 = arith.constant 36 : index
    %18 = vector.load %arg1[%c0_20, %c0_21, %c36] : memref<1x4x512xf32, #tpu.memory_space<vmem>>, vector<1x4x384xf32>
    %19 = vector.shape_cast %18 : vector<1x4x384xf32> to vector<4x384xf32>
    %c24 = arith.constant 24 : index
    %c0_22 = arith.constant 0 : index
    %20 = vector.load %arg4[%c24, %c0_22] : memref<36x384xf32, #tpu.memory_space<vmem>>, vector<4x384xf32>
    tpu.vector_store %arg4[%c24, %c0_22], %19 {strides = array<i32>} : memref<36x384xf32, #tpu.memory_space<vmem>>, vector<4x384xf32>,
    %c0_23 = arith.constant 0 : index
    %c0_24 = arith.constant 0 : index
    %c37 = arith.constant 37 : index
    %21 = vector.load %arg1[%c0_23, %c0_24, %c37] : memref<1x4x512xf32, #tpu.memory_space<vmem>>, vector<1x4x384xf32>
    %22 = vector.shape_cast %21 : vector<1x4x384xf32> to vector<4x384xf32>
    %c28 = arith.constant 28 : index
    %c0_25 = arith.constant 0 : index
    %23 = vector.load %arg4[%c28, %c0_25] : memref<36x384xf32, #tpu.memory_space<vmem>>, vector<4x384xf32>
    tpu.vector_store %arg4[%c28, %c0_25], %22 {strides = array<i32>} : memref<36x384xf32, #tpu.memory_space<vmem>>, vector<4x384xf32>,
    %c0_26 = arith.constant 0 : index
    %c0_27 = arith.constant 0 : index
    %c38 = arith.constant 38 : index
    %24 = vector.load %arg1[%c0_26, %c0_27, %c38] : memref<1x4x512xf32, #tpu.memory_space<vmem>>, vector<1x4x384xf32>
    %25 = vector.shape_cast %24 : vector<1x4x384xf32> to vector<4x384xf32>
    %c32 = arith.constant 32 : index
    %c0_28 = arith.constant 0 : index
    %26 = vector.load %arg4[%c32, %c0_28] : memref<36x384xf32, #tpu.memory_space<vmem>>, vector<4x384xf32>
    tpu.vector_store %arg4[%c32, %c0_28], %25 {strides = array<i32>} : memref<36x384xf32, #tpu.memory_space<vmem>>, vector<4x384xf32>,
    %c0_29 = arith.constant 0 : index
    %c0_30 = arith.constant 0 : index
    %27 = vector.load %arg2[%c0_29, %c0_30] : memref<8x36xf32, #tpu.memory_space<vmem>>, vector<8x36xf32>
    %c0_31 = arith.constant 0 : index
    %c0_32 = arith.constant 0 : index
    %28 = vector.load %arg4[%c0_31, %c0_32] : memref<36x384xf32, #tpu.memory_space<vmem>>, vector<36x384xf32>
    %cst = arith.constant dense<0.000000e+00> : vector<8x384xf32>
    %29 = tpu.matmul %27, %28, %cst {dimension_numbers = #tpu.dot_dimension_numbers<[1], [0], [0], [1], [0, 0, 1, 1], [], []>} : vector<8x36xf32>, vector<36x384xf32>, vector<8x384xf32> -> vector<8x384xf32>
    %c0_33 = arith.constant 0 : index
    %c0_34 = arith.constant 0 : index
    %c0_35 = arith.constant 0 : index
    %30 = vector.load %arg3[%c0_33, %c0_34, %c0_35] : memref<1x8x384xf32, #tpu.memory_space<vmem>>, vector<1x8x384xf32>
    %31 = vector.shape_cast %30 : vector<1x8x384xf32> to vector<8x384xf32>
    %32 = vector.shape_cast %29 : vector<8x384xf32> to vector<1x8x384xf32>
    tpu.vector_store %arg3[%c0_33, %c0_34, %c0_35], %32 {strides = array<i32>} : memref<1x8x384xf32, #tpu.memory_space<vmem>>, vector<1x8x384xf32>,
    return
  }
  func.func @transform_0(%arg0: i32) -> (i32, i32, i32) {
    %c0_i32 = arith.constant 0 : i32
    %c0_i32_0 = arith.constant 0 : i32
    %c0_i32_1 = arith.constant 0 : i32
    return %arg0, %c0_i32, %c0_i32_0 : i32, i32, i32
  }
  func.func @transform_1(%arg0: i32) -> (i32, i32) {
    %c0_i32 = arith.constant 0 : i32
    %c0_i32_0 = arith.constant 0 : i32
    %c0_i32_1 = arith.constant 0 : i32
    return %c0_i32, %c0_i32_0 : i32, i32
  }
  func.func @transform_2(%arg0: i32) -> (i32, i32, i32) {
    %c0_i32 = arith.constant 0 : i32
    %c0_i32_0 = arith.constant 0 : i32
    %c0_i32_1 = arith.constant 0 : i32
    return %arg0, %c0_i32, %c0_i32_0 : i32, i32, i32
  }
}

</mosaic_0001>

<llo_original>
// kernel: _lambda_.1
$region0: #{_lambda_.1}
  #allocation0 [shape = 'u32[]', space=smem, size = 0x4, offset = 0x4, fixed_abs, tag = 'smem constant byte address 0x4 - core index']
  #allocation1 [shape = 'u32[144,128]{1,0:T(1,128)}', space=vmem, size = 0x12000, scoped, tag = 'internal scratch']
  #allocation2 [shape = 'f32[36,384]{1,0:T(8,128)}', space=vmem, size = 0xf000, scoped, tag = 'scratch operand']
  %s0 = inlined_call_operand.vmem [shape: f32[8,4,512], index: 0, kind: input, shape index: {}]
  %s1 = inlined_call_operand.vmem [shape: f32[8,36], index: 1, kind: input, shape index: {}]
  %s2 = inlined_call_operand.vmem [shape: f32[8,8,384], index: 2, kind: output, shape index: {}]
  %s3 = sld [smem:[#allocation0]]
  $region41: #{_lambda_.1} parent=0
    _
  %s5 = ssub.s32 1, %s3
  %s6 = scalar_select 0, %s5, %s3
  loop: start=0, step=1, limit=10
  $region2: #{_lambda_.1} parent=0 // loop_pre_header
    _
  $region3: #{_lambda_.1} parent=0 // loop_header
    %s8 = sphi 0, %s12
    %p9 = scmp.ge.s32.totalorder %s8, 10
    %s18 = sphi 0, %s20
    %s21 = sphi 0, %s18
    %s22 = sphi 0, %s21
    %s38 = sphi 0, %s22
    %s42 = sphi 0, %s42
    %s44 = sphi 0, %s42
    %s45 = sphi 0, %s44
    %s59 = sphi 0, %s45
    %s65 = sphi 0, %s67
    %s68 = sphi 0, %s65
    %s69 = sphi 0, %s68
    %s85 = sphi 0, %s69
  $region4: #{_lambda_.1} parent=0 // loop_header_branch
    %11 = sbr.rel (%p9) target = $region8
  $region5: #{_lambda_.1} parent=0 // loop_body
    %s13 = ssub.s32 %s8, 1
    %s14 = ssub.s32 %s8, 2
    %s15 = sadd.s32 %s8, 1
    %s16 = ssub.s32 %s8, %s15
    %p17 = scmp.eq.s32.totalorder %s16, 0
    %s19 = sadd.s32 %s18, 1
    %s20 = scalar_select %p17, %s18, %s19
    %p23 = pneg %p17
    %p24 = scmp.eq.s32.totalorder %s8, 7
    %p25 = por %p23, %p24
    %p26 = scmp.ne.s32.totalorder %s18, %s21
    %p27 = scmp.eq.s32.totalorder %s8, 0
    %p28 = por %p26, %p27
    %p29 = scmp.ne.s32.totalorder %s18, %s21
    %p30 = scmp.eq.s32.totalorder %s13, 7
    %p31 = por %p29, %p30
    %p32 = scmp.ne.s32.totalorder %s21, %s22
    %p33 = scmp.eq.s32.totalorder %s13, 0
    %p34 = por %p32, %p33
    %p35 = scmp.ne.s32.totalorder %s21, %s22
    %p36 = scmp.eq.s32.totalorder %s14, 7
    %p37 = por %p35, %p36
    %p39 = scmp.ne.s32.totalorder %s22, %s38
    %p40 = scmp.eq.s32.totalorder %s14, 0
    %p41 = por %p39, %p40
    %s43 = sadd.s32 %s42, 1
    %p46 = scmp.eq.s32.totalorder %s8, 7
    %p47 = scmp.ne.s32.totalorder %s42, %s44
    %p48 = scmp.eq.s32.totalorder %s8, 0
    %p49 = por %p47, %p48
    %p50 = scmp.ne.s32.totalorder %s42, %s44
    %p51 = scmp.eq.s32.totalorder %s13, 7
    %p52 = por %p50, %p51
    %p53 = scmp.ne.s32.totalorder %s44, %s45
    %p54 = scmp.eq.s32.totalorder %s13, 0
    %p55 = por %p53, %p54
    %p56 = scmp.ne.s32.totalorder %s44, %s45
    %p57 = scmp.eq.s32.totalorder %s14, 7
    %p58 = por %p56, %p57
    %p60 = scmp.ne.s32.totalorder %s45, %s59
    %p61 = scmp.eq.s32.totalorder %s14, 0
    %p62 = por %p60, %p61
    %s63 = ssub.s32 %s8, %s15
    %p64 = scmp.eq.s32.totalorder %s63, 0
    %s66 = sadd.s32 %s65, 1
    %s67 = scalar_select %p64, %s65, %s66
    %p70 = pneg %p64
    %p71 = scmp.eq.s32.totalorder %s8, 7
    %p72 = por %p70, %p71
    %p73 = scmp.ne.s32.totalorder %s65, %s68
    %p74 = scmp.eq.s32.totalorder %s8, 0
    %p75 = por %p73, %p74
    %p76 = scmp.ne.s32.totalorder %s65, %s68
    %p77 = scmp.eq.s32.totalorder %s13, 7
    %p78 = por %p76, %p77
    %p79 = scmp.ne.s32.totalorder %s68, %s69
    %p80 = scmp.eq.s32.totalorder %s13, 0
    %p81 = por %p79, %p80
    %p82 = scmp.ne.s32.totalorder %s68, %s69
    %p83 = scmp.eq.s32.totalorder %s14, 7
    %p84 = por %p82, %p83
    %p86 = scmp.ne.s32.totalorder %s69, %s85
    %p87 = scmp.eq.s32.totalorder %s14, 0
    %p88 = por %p86, %p87
    %p89 = scmp.le.s32.totalorder 1, %s8
    %p90 = scmp.lt.s32.totalorder %s8, 9
    %p91 = pnand %p89, %p90
    %p92 = pneg %p91
    // Predicated region
    $region9: #{_lambda_.1} parent=5 // pred_check
      _
    $region10: #{_lambda_.1} parent=5 // pred_check_branch
      %94 = sbr.rel (%p91) target = $region12
    $region11: #{_lambda_.1} parent=5 // pred_region
      %s95 = ssub.s32 %s8, 1
      // Predicated region
      $region13: #{_lambda_.1} parent=11 // pred_check
        %p96 = pneg %p55
      $region14: #{_lambda_.1} parent=11 // pred_check_branch
        %98 = sbr.rel (%p96) target = $region16
      $region15: #{_lambda_.1} parent=11 // pred_region
        _
      $region16: #{_lambda_.1} parent=11 // pred_fallthru
        _
    $region12: #{_lambda_.1} parent=5 // pred_fallthru
      _
    %p99 = scmp.lt.s32.totalorder %s8, 8
    // Predicated region
    $region17: #{_lambda_.1} parent=5 // pred_check
      %p100 = pneg %p99
    $region18: #{_lambda_.1} parent=5 // pred_check_branch
      %102 = sbr.rel (%p100) target = $region20
    $region19: #{_lambda_.1} parent=5 // pred_region
      // Predicated region
      $region21: #{_lambda_.1} parent=19 // pred_check
        %p103 = pneg %p28
      $region22: #{_lambda_.1} parent=19 // pred_check_branch
        %105 = sbr.rel (%p103) target = $region24
      $region23: #{_lambda_.1} parent=19 // pred_region
        %p106 = scmp.lt.s32.totalorder %s8, 7
        %s107 = scalar_select %p106, %s8, 7
        %s108 = smul.addr %s107, 4
        %s109 = smul.addr %s108, 4
        %s110 = scalar_lea.vmem %s0, %s109
      $region24: #{_lambda_.1} parent=19 // pred_fallthru
        _
    $region20: #{_lambda_.1} parent=5 // pred_fallthru
      _
    %p111 = scmp.le.s32.totalorder 1, %s8
    %p112 = scmp.lt.s32.totalorder %s8, 9
    %p113 = pnand %p111, %p112
    %p114 = pneg %p113
    // Predicated region
    $region25: #{_lambda_.1} parent=5 // pred_check
      _
    $region26: #{_lambda_.1} parent=5 // pred_check_branch
      %116 = sbr.rel (%p113) target = $region28
    $region27: #{_lambda_.1} parent=5 // pred_region
      %s117 = ssub.s32 %s8, 1
      %p118 = scmp.lt.s32.totalorder %s13, 7
      %s119 = scalar_select %p118, %s13, 7
      %s120 = smul.addr %s119, 4
      %s121 = smul.addr %s120, 4
      %s122 = scalar_lea.vmem %s0, %s121
      %p123 = pneg %p34
      %p124 = pneg %p31
      %p125 = pneg %p55
      %p126 = pneg %p52
      %p127 = pneg %p81
      %p128 = pneg %p78
      %p129 = scmp.lt.s32.totalorder %s13, 7
      %s130 = scalar_select %p129, %s13, 7
      %s131 = smul.addr %s130, 3
      %s132 = smul.addr %s131, 8
      %s133 = scalar_lea.vmem %s2, %s132
      %p134 = scmp.lt.s32.totalorder %s13, 7
      %s135 = scalar_select %p134, %s13, 7
      %s136 = smul.addr %s135, 4
      %s137 = smul.addr %s136, 4
      %s138 = scalar_lea.vmem %s0, %s137
      %p139 = scmp.lt.s32.totalorder %s13, 7
      %s140 = scalar_select %p139, %s13, 7
      %s141 = smul.addr %s140, 3
      %s142 = smul.addr %s141, 8
      %s143 = scalar_lea.vmem %s2, %s142
      %v144 = vld [vmem:[%s138] sm:$0xff]
      %v145 = vld [vmem:[%s138 + $0x8] sm:$0xf]
      %v147 = vcombine.high %v144, %v144
      %149 = vst [vmem:[#allocation2] sm:$0xf] %v144
      %150 = vst [vmem:[#allocation2 + $0x8] sm:$0xf] %v147
      %151 = vst [vmem:[#allocation2 + $0x10] sm:$0xf] %v145
      %v152 = vld [vmem:[%s138] sm:$0xff]
      %v153 = vld [vmem:[%s138 + $0x8] sm:$0xff]
      %v156 = vcombine.low %v152, %v152
      %v157 = vcombine.low %v153, %v153
      %158 = vrot.lane.b32.xlu0 %v156, 127
      %v159 = vpop.permute.xlu0 %158
      %160 = vrot.lane.b32.xlu0 %v152, 127
      %v161 = vpop.permute.xlu0 %160
      %162 = vrot.lane.b32.xlu0 %v157, 127
      %v163 = vpop.permute.xlu0 %162
      %164 = vrot.lane.b32.xlu0 %v153, 127
      %v165 = vpop.permute.xlu0 %164
      %vm166 = vcmask 1039360
      %v167 = vsel %vm166, %v159, %v161
      %v168 = vsel %vm166, %v161, %v163
      %v169 = vsel %vm166, %v163, %v165
      %173 = vst [vmem:[#allocation2] sm:$0xf0] %v167
      %174 = vst [vmem:[#allocation2 + $0x8] sm:$0xf0] %v168
      %175 = vst [vmem:[#allocation2 + $0x10] sm:$0xf0] %v169
      %v176 = vld [vmem:[%s138] sm:$0xff]
      %v177 = vld [vmem:[%s138 + $0x8] sm:$0xff]
      %v180 = vcombine.high %v176, %v176
      %v181 = vcombine.high %v177, %v177
      %182 = vrot.lane.b32.xlu0 %v176, 126
      %v183 = vpop.permute.xlu0 %182
      %184 = vrot.lane.b32.xlu0 %v180, 126
      %v185 = vpop.permute.xlu0 %184
      %186 = vrot.lane.b32.xlu0 %v177, 126
      %v187 = vpop.permute.xlu0 %186
      %188 = vrot.lane.b32.xlu0 %v181, 126
      %v189 = vpop.permute.xlu0 %188
      %vm190 = vcmask 1031168
      %v191 = vsel %vm190, %v183, %v185
      %v192 = vsel %vm190, %v185, %v187
      %v193 = vsel %vm190, %v187, %v189
      %197 = vst [vmem:[#allocation2 + $0x18] sm:$0xf] %v191
      %198 = vst [vmem:[#allocation2 + $0x20] sm:$0xf] %v192
      %199 = vst [vmem:[#allocation2 + $0x28] sm:$0xf] %v193
      %v200 = vld [vmem:[%s138] sm:$0xff]
      %v201 = vld [vmem:[%s138 + $0x8] sm:$0xff]
      %v204 = vcombine.low %v200, %v200
      %v205 = vcombine.low %v201, %v201
      %206 = vrot.lane.b32.xlu0 %v204, 110
      %v207 = vpop.permute.xlu0 %206
      %208 = vrot.lane.b32.xlu0 %v200, 110
      %v209 = vpop.permute.xlu0 %208
      %210 = vrot.lane.b32.xlu0 %v205, 110
      %v211 = vpop.permute.xlu0 %210
      %212 = vrot.lane.b32.xlu0 %v201, 110
      %v213 = vpop.permute.xlu0 %212
      %vm214 = vcmask 900096
      %v215 = vsel %vm214, %v207, %v209
      %v216 = vsel %vm214, %v209, %v211
      %v217 = vsel %vm214, %v211, %v213
      %221 = vst [vmem:[#allocation2 + $0x18] sm:$0xf0] %v215
      %222 = vst [vmem:[#allocation2 + $0x20] sm:$0xf0] %v216
      %223 = vst [vmem:[#allocation2 + $0x28] sm:$0xf0] %v217
      %v224 = vld [vmem:[%s138] sm:$0xff]
      %v225 = vld [vmem:[%s138 + $0x8] sm:$0xff]
      %v228 = vcombine.high %v224, %v224
      %v229 = vcombine.high %v225, %v225
      %230 = vrot.lane.b32.xlu0 %v224, 109
      %v231 = vpop.permute.xlu0 %230
      %232 = vrot.lane.b32.xlu0 %v228, 109
      %v233 = vpop.permute.xlu0 %232
      %234 = vrot.lane.b32.xlu0 %v225, 109
      %v235 = vpop.permute.xlu0 %234
      %236 = vrot.lane.b32.xlu0 %v229, 109
      %v237 = vpop.permute.xlu0 %236
      %vm238 = vcmask 891904
      %v239 = vsel %vm238, %v231, %v233
      %v240 = vsel %vm238, %v233, %v235
      %v241 = vsel %vm238, %v235, %v237
      %245 = vst [vmem:[#allocation2 + $0x30] sm:$0xf] %v239
      %246 = vst [vmem:[#allocation2 + $0x38] sm:$0xf] %v240
      %247 = vst [vmem:[#allocation2 + $0x40] sm:$0xf] %v241
      %v248 = vld [vmem:[%s138] sm:$0xff]
      %v249 = vld [vmem:[%s138 + $0x8] sm:$0xff]
      %v252 = vcombine.low %v248, %v248
      %v253 = vcombine.low %v249, %v249
      %254 = vrot.lane.b32.xlu0 %v252, 108
      %v255 = vpop.permute.xlu0 %254
      %256 = vrot.lane.b32.xlu0 %v248, 108
      %v257 = vpop.permute.xlu0 %256
      %258 = vrot.lane.b32.xlu0 %v253, 108
      %v259 = vpop.permute.xlu0 %258
      %260 = vrot.lane.b32.xlu0 %v249, 108
      %v261 = vpop.permute.xlu0 %260
      %vm262 = vcmask 883712
      %v263 = vsel %vm262, %v255, %v257
      %v264 = vsel %vm262, %v257, %v259
      %v265 = vsel %vm262, %v259, %v261
      %269 = vst [vmem:[#allocation2 + $0x30] sm:$0xf0] %v263
      %270 = vst [vmem:[#allocation2 + $0x38] sm:$0xf0] %v264
      %271 = vst [vmem:[#allocation2 + $0x40] sm:$0xf0] %v265
      %v272 = vld [vmem:[%s138] sm:$0xff]
      %v273 = vld [vmem:[%s138 + $0x8] sm:$0xff]
      %v276 = vcombine.high %v272, %v272
      %v277 = vcombine.high %v273, %v273
      %278 = vrot.lane.b32.xlu0 %v272, 92
      %v279 = vpop.permute.xlu0 %278
      %280 = vrot.lane.b32.xlu0 %v276, 92
      %v281 = vpop.permute.xlu0 %280
      %282 = vrot.lane.b32.xlu0 %v273, 92
      %v283 = vpop.permute.xlu0 %282
      %284 = vrot.lane.b32.xlu0 %v277, 92
      %v285 = vpop.permute.xlu0 %284
      %vm286 = vcmask 752640
      %v287 = vsel %vm286, %v279, %v281
      %v288 = vsel %vm286, %v281, %v283
      %v289 = vsel %vm286, %v283, %v285
      %293 = vst [vmem:[#allocation2 + $0x48] sm:$0xf] %v287
      %294 = vst [vmem:[#allocation2 + $0x50] sm:$0xf] %v288
      %295 = vst [vmem:[#allocation2 + $0x58] sm:$0xf] %v289
      %v296 = vld [vmem:[%s138] sm:$0xff]
      %v297 = vld [vmem:[%s138 + $0x8] sm:$0xff]
      %v300 = vcombine.low %v296, %v296
      %v301 = vcombine.low %v297, %v297
      %302 = vrot.lane.b32.xlu0 %v300, 91
      %v303 = vpop.permute.xlu0 %302
      %304 = vrot.lane.b32.xlu0 %v296, 91
      %v305 = vpop.permute.xlu0 %304
      %306 = vrot.lane.b32.xlu0 %v301, 91
      %v307 = vpop.permute.xlu0 %306
      %308 = vrot.lane.b32.xlu0 %v297, 91
      %v309 = vpop.permute.xlu0 %308
      %vm310 = vcmask 744448
      %v311 = vsel %vm310, %v303, %v305
      %v312 = vsel %vm310, %v305, %v307
      %v313 = vsel %vm310, %v307, %v309
      %317 = vst [vmem:[#allocation2 + $0x48] sm:$0xf0] %v311
      %318 = vst [vmem:[#allocation2 + $0x50] sm:$0xf0] %v312
      %319 = vst [vmem:[#allocation2 + $0x58] sm:$0xf0] %v313
      %v320 = vld [vmem:[%s138] sm:$0xff]
      %v321 = vld [vmem:[%s138 + $0x8] sm:$0xff]
      %v324 = vcombine.high %v320, %v320
      %v325 = vcombine.high %v321, %v321
      %326 = vrot.lane.b32.xlu0 %v320, 90
      %v327 = vpop.permute.xlu0 %326
      %328 = vrot.lane.b32.xlu0 %v324, 90
      %v329 = vpop.permute.xlu0 %328
      %330 = vrot.lane.b32.xlu0 %v321, 90
      %v331 = vpop.permute.xlu0 %330
      %332 = vrot.lane.b32.xlu0 %v325, 90
      %v333 = vpop.permute.xlu0 %332
      %vm334 = vcmask 736256
      %v335 = vsel %vm334, %v327, %v329
      %v336 = vsel %vm334, %v329, %v331
      %v337 = vsel %vm334, %v331, %v333
      %341 = vst [vmem:[#allocation2 + $0x60] sm:$0xf] %v335
      %342 = vst [vmem:[#allocation2 + $0x68] sm:$0xf] %v336
      %343 = vst [vmem:[#allocation2 + $0x70] sm:$0xf] %v337
      %v344 = vld [vmem:[%s1] sm:$0xff]
      %v345 = vld [vmem:[#allocation2] sm:$0xff]
      %v346 = vld [vmem:[#allocation2 + $0x8] sm:$0xff]
      %v347 = vld [vmem:[#allocation2 + $0x10] sm:$0xff]
      %v348 = vld [vmem:[#allocation2 + $0x18] sm:$0xff]
      %v349 = vld [vmem:[#allocation2 + $0x20] sm:$0xff]
      %v350 = vld [vmem:[#allocation2 + $0x28] sm:$0xff]
      %v351 = vld [vmem:[#allocation2 + $0x30] sm:$0xff]
      %v352 = vld [vmem:[#allocation2 + $0x38] sm:$0xff]
      %v353 = vld [vmem:[#allocation2 + $0x40] sm:$0xff]
      %v354 = vld [vmem:[#allocation2 + $0x48] sm:$0xff]
      %v355 = vld [vmem:[#allocation2 + $0x50] sm:$0xff]
      %v356 = vld [vmem:[#allocation2 + $0x58] sm:$0xff]
      %v357 = vld [vmem:[#allocation2 + $0x60] sm:$0xf]
      %v358 = vld [vmem:[#allocation2 + $0x68] sm:$0xf]
      %v359 = vld [vmem:[#allocation2 + $0x70] sm:$0xf]
      %vm360 = vcmask 293888
      %v362 = vsel %vm360, %v344, 0
      %vm364 = vcmask 1043456
      %v366 = vsel %vm364, %v357, 0
      %v369 = vsel %vm364, %v358, 0
      %v372 = vsel %vm364, %v359, 0
      %374 = vmatprep.subr.mxu0 %v346
      %375 = vmatpush1.msra.mxu0 %v345
      %376 = vmatprep.subr.mxu0 %v349
      %377 = vmatpush1.msra.mxu0 %v348
      %378 = vmatprep.subr.mxu0 %v352
      %379 = vmatpush1.msra.mxu0 %v351
      %380 = vmatprep.subr.mxu0 %v355
      %381 = vmatpush1.msra.mxu0 %v354
      %382 = vmatprep.subr.mxu0 %v369
      %383 = vmatpush1.msra.mxu0 %v366
      %384 = vmatprep.subr.mxu0 0.0
      %385 = vmatpush1.msra.mxu0 0.0
      %386 = vmatprep.subr.mxu0 0.0
      %387 = vmatpush1.msra.mxu0 0.0
      %388 = vmatprep.subr.mxu0 0.0
      %389 = vmatpush1.msra.mxu0 0.0
      %390 = vmatprep.subr.mxu0 0.0
      %391 = vmatpush1.msra.mxu0 0.0
      %392 = vmatprep.subr.mxu0 0.0
      %393 = vmatpush1.msra.mxu0 0.0
      %394 = vmatprep.subr.mxu0 0.0
      %395 = vmatpush1.msra.mxu0 0.0
      %396 = vmatprep.subr.mxu0 0.0
      %397 = vmatpush1.msra.mxu0 0.0
      %398 = vmatprep.subr.mxu0 0.0
      %399 = vmatpush1.msra.mxu0 0.0
      %400 = vmatprep.subr.mxu0 0.0
      %401 = vmatpush1.msra.mxu0 0.0
      %402 = vmatprep.subr.mxu0 0.0
      %403 = vmatpush1.msra.mxu0 0.0
      %404 = vmatprep.subr.mxu0 0.0
      %405 = vmatpush1.msra.mxu0 0.0
      %406 = vmatprep.subr.mxu0 0.0
      %407 = vmatpush1.msra.mxu0 0.0
      %408 = vmatprep.subr.mxu0 0.0
      %409 = vmatpush1.msra.mxu0 0.0
      %410 = vmatprep.subr.mxu0 0.0
      %411 = vmatpush1.msra.mxu0 0.0
      %412 = vmatprep.subr.mxu0 0.0
      %413 = vmatpush1.msra.mxu0 0.0
      %414 = vmatprep.subr.mxu0 0.0
      %415 = vmatpush1.msra.mxu0 0.0
      %416 = vmatprep.subr.mxu0 0.0
      %417 = vmatpush1.msra.mxu0 0.0
      %418 = vmatprep.subr.mxu0 0.0
      %419 = vmatpush1.msra.mxu0 0.0
      %420 = vmatprep.subr.mxu0 0.0
      %421 = vmatpush1.msra.mxu0 0.0
      %422 = vmatprep.subr.mxu0 0.0
      %423 = vmatpush1.msra.mxu0 0.0
      %424 = vmatprep.subr.mxu0 0.0
      %425 = vmatpush1.msra.mxu0 0.0
      %426 = vmatprep.subr.mxu0 0.0
      %427 = vmatpush1.msra.mxu0 0.0
      %428 = vmatprep.subr.mxu0 0.0
      %429 = vmatpush1.msra.mxu0 0.0
      %430 = vmatprep.subr.mxu0 0.0
      %431 = vmatpush1.msra.mxu0 0.0
      %432 = vmatprep.subr.mxu0 0.0
      %433 = vmatpush1.msra.mxu0 0.0
      %434 = vmatprep.subr.mxu0 0.0
      %435 = vmatpush1.msra.mxu0 0.0
      %436 = vmatprep.subr.mxu0 0.0
      %437 = vmatpush1.msra.mxu0 0.0
      %438 = vmatprep.mubr.f32.mxu0 0.0
      %439 = vmatmul.mubr.f32.gmra.mrb[0].mxu0 %v362
      %v440 = vpop.f32.mrb[0].mxu0
      %v441 = vadd.f32 0.0, %v440
      %v442 = vpop.f32.mrb[0].mxu0
      %v443 = vadd.f32 0.0, %v442
      %444 = vdwg.mxu0
      %445 = vmatprep.subr.mxu0 0.0
      %446 = vmatpush1.msra.mxu0 %v347
      %447 = vmatprep.subr.mxu0 0.0
      %448 = vmatpush1.msra.mxu0 %v350
      %449 = vmatprep.subr.mxu0 0.0
      %450 = vmatpush1.msra.mxu0 %v353
      %451 = vmatprep.subr.mxu0 0.0
      %452 = vmatpush1.msra.mxu0 %v356
      %453 = vmatprep.subr.mxu0 0.0
      %454 = vmatpush1.msra.mxu0 %v372
      %455 = vmatprep.subr.mxu0 0.0
      %456 = vmatpush1.msra.mxu0 0.0
      %457 = vmatprep.subr.mxu0 0.0
      %458 = vmatpush1.msra.mxu0 0.0
      %459 = vmatprep.subr.mxu0 0.0
      %460 = vmatpush1.msra.mxu0 0.0
      %461 = vmatprep.subr.mxu0 0.0
      %462 = vmatpush1.msra.mxu0 0.0
      %463 = vmatprep.subr.mxu0 0.0
      %464 = vmatpush1.msra.mxu0 0.0
      %465 = vmatprep.subr.mxu0 0.0
      %466 = vmatpush1.msra.mxu0 0.0
      %467 = vmatprep.subr.mxu0 0.0
      %468 = vmatpush1.msra.mxu0 0.0
      %469 = vmatprep.subr.mxu0 0.0
      %470 = vmatpush1.msra.mxu0 0.0
      %471 = vmatprep.subr.mxu0 0.0
      %472 = vmatpush1.msra.mxu0 0.0
      %473 = vmatprep.subr.mxu0 0.0
      %474 = vmatpush1.msra.mxu0 0.0
      %475 = vmatprep.subr.mxu0 0.0
      %476 = vmatpush1.msra.mxu0 0.0
      %477 = vmatprep.subr.mxu0 0.0
      %478 = vmatpush1.msra.mxu0 0.0
      %479 = vmatprep.subr.mxu0 0.0
      %480 = vmatpush1.msra.mxu0 0.0
      %481 = vmatprep.subr.mxu0 0.0
      %482 = vmatpush1.msra.mxu0 0.0
      %483 = vmatprep.subr.mxu0 0.0
      %484 = vmatpush1.msra.mxu0 0.0
      %485 = vmatprep.subr.mxu0 0.0
      %486 = vmatpush1.msra.mxu0 0.0
      %487 = vmatprep.subr.mxu0 0.0
      %488 = vmatpush1.msra.mxu0 0.0
      %489 = vmatprep.subr.mxu0 0.0
      %490 = vmatpush1.msra.mxu0 0.0
      %491 = vmatprep.subr.mxu0 0.0
      %492 = vmatpush1.msra.mxu0 0.0
      %493 = vmatprep.subr.mxu0 0.0
      %494 = vmatpush1.msra.mxu0 0.0
      %495 = vmatprep.subr.mxu0 0.0
      %496 = vmatpush1.msra.mxu0 0.0
      %497 = vmatprep.subr.mxu0 0.0
      %498 = vmatpush1.msra.mxu0 0.0
      %499 = vmatprep.subr.mxu0 0.0
      %500 = vmatpush1.msra.mxu0 0.0
      %501 = vmatprep.subr.mxu0 0.0
      %502 = vmatpush1.msra.mxu0 0.0
      %503 = vmatprep.subr.mxu0 0.0
      %504 = vmatpush1.msra.mxu0 0.0
      %505 = vmatprep.subr.mxu0 0.0
      %506 = vmatpush1.msra.mxu0 0.0
      %507 = vmatprep.subr.mxu0 0.0
      %508 = vmatpush1.msra.mxu0 0.0
      %509 = vmatprep.mubr.f32.mxu0 0.0
      %510 = vmatmul.mubr.f32.gmra.mrb[0].mxu0 %v362
      %v511 = vpop.f32.mrb[0].mxu0
      %v512 = vadd.f32 0.0, %v511
      %v513 = vpop.f32.mrb[0].mxu0
      %514 = vdwg.mxu0
      %515 = vst [vmem:[%s143] sm:$0xff] %v441
      %516 = vst [vmem:[%s143 + $0x8] sm:$0xff] %v443
      %517 = vst [vmem:[%s143 + $0x10] sm:$0xff] %v512
      %p518 = scmp.lt.s32.totalorder %s13, 7
      %s519 = scalar_select %p518, %s13, 7
      %s520 = smul.addr %s519, 3
      %s521 = smul.addr %s520, 8
      %s522 = scalar_lea.vmem %s2, %s521
      // Predicated region
      $region29: #{_lambda_.1} parent=27 // pred_check
        %p523 = pneg %p78
      $region30: #{_lambda_.1} parent=27 // pred_check_branch
        %525 = sbr.rel (%p523) target = $region32
      $region31: #{_lambda_.1} parent=27 // pred_region
        _
      $region32: #{_lambda_.1} parent=27 // pred_fallthru
        _
    $region28: #{_lambda_.1} parent=5 // pred_fallthru
      _
    %p526 = scmp.le.s32.totalorder 2, %s8
    // Predicated region
    $region33: #{_lambda_.1} parent=5 // pred_check
      %p527 = pneg %p526
    $region34: #{_lambda_.1} parent=5 // pred_check_branch
      %529 = sbr.rel (%p527) target = $region36
    $region35: #{_lambda_.1} parent=5 // pred_region
      %s530 = ssub.s32 %s8, 2
      // Predicated region
      $region37: #{_lambda_.1} parent=35 // pred_check
        %p531 = pneg %p84
      $region38: #{_lambda_.1} parent=35 // pred_check_branch
        %533 = sbr.rel (%p531) target = $region40
      $region39: #{_lambda_.1} parent=35 // pred_region
        %p534 = scmp.lt.s32.totalorder %s14, 7
        %s535 = scalar_select %p534, %s14, 7
        %s536 = smul.addr %s535, 3
        %s537 = smul.addr %s536, 8
        %s538 = scalar_lea.vmem %s2, %s537
      $region40: #{_lambda_.1} parent=35 // pred_fallthru
        _
    $region36: #{_lambda_.1} parent=5 // pred_fallthru
      _
  $region6: #{_lambda_.1} parent=0 // loop_footer
    %s12 = sadd.s32 1, %s8
  $region7: #{_lambda_.1} parent=0 // loop_footer_branch
    %7 = sbr.rel target = $region3
  $region8: #{_lambda_.1} parent=0 // loop_exit
    _

</llo_original>
